<compile_context>
chip_gen: v7x
topology: tpu7x:2x2x1
jax: 0.10.0
libtpu: 0.0.40
codegen_flags: <defaults>
</compile_context>

<pallas_src>
import jax
import jax.numpy as jnp
from jax import lax
from jax.experimental import pallas as pl
from jax.experimental.pallas import tpu as pltpu


# ----------------------------------------------------------------------------
# Kernel 1: fused input projection for both directions
#   (N, E) @ (E, 8H) + (1, 8H) -> (N, 8H), columns = [fw i|f|g|o | bw i|f|g|o]
# ----------------------------------------------------------------------------
def _matmul_bias_kernel(x_ref, w_ref, b_ref, o_ref):
    o_ref[...] = (
        jnp.dot(x_ref[...], w_ref[...], preferred_element_type=jnp.float32)
        + b_ref[...]
    )


def input_projection(x_flat, w_t, bias, row_tile=256):
    # TODO(synk): at production sizes cast x/w to bfloat16 here on v6e/v7x
    # (keep f32 accumulation via preferred_element_type); kept f32 to match
    # the PyTorch reference numerics exactly.
    n, e = x_flat.shape
    g = w_t.shape[1]
    tm = min(row_tile, n)
    assert n % tm == 0, "row count must be divisible by the row tile"
    return pl.pallas_call(
        _matmul_bias_kernel,
        out_shape=jax.ShapeDtypeStruct((n, g), jnp.float32),
        grid=(n // tm,),
        in_specs=[
            pl.BlockSpec((tm, e), lambda i: (i, 0)),
            pl.BlockSpec((e, g), lambda i: (0, 0)),
            pl.BlockSpec((1, g), lambda i: (0, 0)),
        ],
        out_specs=pl.BlockSpec((tm, g), lambda i: (i, 0)),
        compiler_params=pltpu.CompilerParams(
            dimension_semantics=("parallel",)
        ),
    )(x_flat, w_t, bias)


# ----------------------------------------------------------------------------
# Kernel 2: single-layer bidirectional LSTM recurrence.
# Grid is (2,) over direction (0 = forward, 1 = backward); the whole time loop
# runs inside one kernel invocation with state carried in registers. Only the
# final hidden state of each direction is written (pool_type='last').
# ----------------------------------------------------------------------------
def _lstm_dir_kernel(xp_ref, whh_ref, hfin_ref):
    # xp_ref:   (T, B, 4H)  per-step input projections for THIS direction
    # whh_ref:  (1, H, 4H)  hidden-to-hidden weight, gate-major [i|f|g|o]
    # hfin_ref: (1, B, H)   final hidden state of this direction
    d = pl.program_id(0)
    t_len, b, _ = xp_ref.shape
    hidden = hfin_ref.shape[-1]

    whh = whh_ref[0]                              # (H, 4H), loaded once

    def step(t, carry):
        h, c = carry
        # forward reads t, backward reads T-1-t (sequence reversal handled
        # here, so no host-side flip of the projected activations is needed)
        t_idx = jnp.where(d == 0, t, t_len - 1 - t)
        xt = xp_ref[t_idx]                        # (B, 4H), untiled-dim index
        gates = xt + jnp.dot(h, whh, preferred_element_type=jnp.float32)
        i_g = jax.nn.sigmoid(gates[:, 0 * hidden:1 * hidden])
        f_g = jax.nn.sigmoid(gates[:, 1 * hidden:2 * hidden])
        g_g = jnp.tanh(gates[:, 2 * hidden:3 * hidden])
        o_g = jax.nn.sigmoid(gates[:, 3 * hidden:4 * hidden])
        c_new = f_g * c + i_g * g_g
        h_new = o_g * jnp.tanh(c_new)
        return h_new, c_new

    h0 = jnp.zeros((b, hidden), jnp.float32)
    c0 = jnp.zeros((b, hidden), jnp.float32)
    h_fin, _ = lax.fori_loop(0, t_len, step, (h0, c0), unroll=True)
    hfin_ref[0] = h_fin


def lstm_bidir_last(xp_tm, w_hh_stack, hidden):
    # xp_tm:      (T, B, 8H)  columns = [fw gates | bw gates]
    # w_hh_stack: (2, H, 4H)  [fw, bw]
    t_len, b, _ = xp_tm.shape
    return pl.pallas_call(
        _lstm_dir_kernel,
        out_shape=jax.ShapeDtypeStruct((2, b, hidden), jnp.float32),
        grid=(2,),
        in_specs=[
            pl.BlockSpec((t_len, b, 4 * hidden), lambda d: (0, 0, d)),
            pl.BlockSpec((1, hidden, 4 * hidden), lambda d: (d, 0, 0)),
        ],
        out_specs=pl.BlockSpec((1, b, hidden), lambda d: (d, 0, 0)),
        compiler_params=pltpu.CompilerParams(
            dimension_semantics=("parallel",)   # fw/bw independent -> 2 TCs on v7x
        ),
    )(xp_tm, w_hh_stack)                        # (2, B, H): [fw final, bw final]


# ----------------------------------------------------------------------------
# Full SentEncoder_Emb forward (eval mode)
# ----------------------------------------------------------------------------
def sent_encoder_emb_forward(x_ids, params):
    emb_table = params["emb"]                          # (V, E)
    hidden = params["hidden_size"]

    # TODO(synk): emb_drop / rnn dropout are identity in eval mode; training-
    # mode dropout masks are not implemented.
    h_tm = jnp.take(emb_table, x_ids.T, axis=0)        # (T, B, E) time-major
    t_len, b, e = h_tm.shape
    x_flat = h_tm.reshape(t_len * b, e).astype(jnp.float32)

    # Both directions' input projections in one matmul: (T*B, 8H)
    xp = input_projection(x_flat, params["w_ih_t_all"], params["bias_all"])
    xp_tm = xp.reshape(t_len, b, 8 * hidden)           # (T, B, 8H)

    h_fin = lstm_bidir_last(xp_tm, params["w_hh_all"], hidden)   # (2, B, H)

    # pool_type='last', bidirectional=True -> cat(h_n[-2], h_n[-1]) = cat(fw, bw)
    pooled = jnp.concatenate([h_fin[0], h_fin[1]], axis=-1)      # (B, 2H)
    return pooled


# ----------------------------------------------------------------------------
# Deterministic parameter init (mirrors shapes of nn.Embedding + nn.LSTM)
# ----------------------------------------------------------------------------
def init_params(key, vocab, emb_dim, hidden):
    keys = jax.random.split(key, 9)
    kscale = 1.0 / jnp.sqrt(jnp.float32(hidden))

    def unif(k, shape):
        return jax.random.uniform(
            k, shape, jnp.float32, minval=-kscale, maxval=kscale
        )

    emb = jax.random.normal(keys[0], (vocab, emb_dim), jnp.float32)

    w_ih_t_dirs, w_hh_t_dirs, bias_dirs = [], [], []
    idx = 1
    for _ in range(2):                                  # forward, backward
        w_ih = unif(keys[idx], (4 * hidden, emb_dim)); idx += 1   # (4H, E)
        w_hh = unif(keys[idx], (4 * hidden, hidden)); idx += 1    # (4H, H)
        b_ih = unif(keys[idx], (4 * hidden,)); idx += 1
        b_hh = unif(keys[idx], (4 * hidden,)); idx += 1
        w_ih_t_dirs.append(w_ih.T)                      # (E, 4H), [i|f|g|o]
        w_hh_t_dirs.append(w_hh.T)                      # (H, 4H), [i|f|g|o]
        bias_dirs.append(b_ih + b_hh)                   # (4H,)

    return {
        "hidden_size": hidden,
        "emb": emb,
        # fused [fw | bw] input-projection weight & bias (gate-major per dir)
        "w_ih_t_all": jnp.concatenate(w_ih_t_dirs, axis=1),           # (E, 8H)
        "bias_all": jnp.concatenate(bias_dirs).reshape(1, 8 * hidden),  # (1, 8H)
        # stacked per-direction hidden-to-hidden weights
        "w_hh_all": jnp.stack(w_hh_t_dirs, axis=0),                   # (2, H, 4H)
    }


if __name__ == "__main__":
    B, T = 2, 8
    VOCAB, EMB_DIM, HIDDEN = 50, 32, 32

    key = jax.random.PRNGKey(0)
    key_ids, key_params = jax.random.split(key)

    x_ids = jax.random.randint(key_ids, (B, T), 0, VOCAB, dtype=jnp.int32)
    params = init_params(key_params, VOCAB, EMB_DIM, HIDDEN)

    out = sent_encoder_emb_forward(x_ids, params)
    out = jax.block_until_ready(out)

    assert out.shape == (B, 2 * HIDDEN), out.shape
    assert bool(jnp.all(jnp.isfinite(out)))
    print("KERNEL_OK")
</pallas_src>

<mosaic_0001>
module attributes {stable_mosaic.version = 11 : i64} {
  func.func @_matmul_bias_kernel(%arg0: i32, %arg1: memref<16x32xf32, #tpu.memory_space<vmem>>, %arg2: memref<32x256xf32, #tpu.memory_space<vmem>>, %arg3: memref<1x256xf32, #tpu.memory_space<vmem>>, %arg4: memref<16x256xf32, #tpu.memory_space<vmem>>) attributes {dimension_semantics = [#tpu.dimension_semantics<parallel>], iteration_bounds = array<i64: 1>, scalar_prefetch = 0 : i64, scratch_operands = 0 : i64, tpu.core_type = #tpu.core_type<tc>, window_params = [{transform_indices = @transform_0, window_bounds = array<i64: 16, 32>}, {pipeline_mode = #tpu.pipeline_mode<synchronous>, transform_indices = @transform_1, window_bounds = array<i64: 32, 256>}, {pipeline_mode = #tpu.pipeline_mode<synchronous>, transform_indices = @transform_2, window_bounds = array<i64: 1, 256>}, {transform_indices = @transform_3, window_bounds = array<i64: 16, 256>}]} {
    %c0 = arith.constant 0 : index
    %c0_0 = arith.constant 0 : index
    %0 = vector.load %arg1[%c0, %c0_0] : memref<16x32xf32, #tpu.memory_space<vmem>>, vector<16x32xf32>
    %c0_1 = arith.constant 0 : index
    %c0_2 = arith.constant 0 : index
    %1 = vector.load %arg2[%c0_1, %c0_2] : memref<32x256xf32, #tpu.memory_space<vmem>>, vector<32x256xf32>
    %cst = arith.constant dense<0.000000e+00> : vector<16x256xf32>
    %2 = tpu.matmul %0, %1, %cst {dimension_numbers = #tpu.dot_dimension_numbers<[1], [0], [0], [1], [0, 0, 1, 1], [], []>} : vector<16x32xf32>, vector<32x256xf32>, vector<16x256xf32> -> vector<16x256xf32>
    %c0_3 = arith.constant 0 : index
    %c0_4 = arith.constant 0 : index
    %3 = vector.load %arg3[%c0_3, %c0_4] : memref<1x256xf32, #tpu.memory_space<vmem>>, vector<1x256xf32>
    %4 = vector.broadcast %3 : vector<1x256xf32> to vector<16x256xf32>
    %5 = arith.addf %2, %4 : vector<16x256xf32>
    %c0_5 = arith.constant 0 : index
    %c0_6 = arith.constant 0 : index
    %6 = vector.load %arg4[%c0_5, %c0_6] : memref<16x256xf32, #tpu.memory_space<vmem>>, vector<16x256xf32>
    tpu.vector_store %arg4[%c0_5, %c0_6], %5 {strides = array<i32>} : memref<16x256xf32, #tpu.memory_space<vmem>>, vector<16x256xf32>,
    return
  }
  func.func @transform_0(%arg0: i32) -> (i32, i32) {
    %c0_i32 = arith.constant 0 : i32
    %c0_i32_0 = arith.constant 0 : i32
    return %arg0, %c0_i32 : i32, i32
  }
  func.func @transform_1(%arg0: i32) -> (i32, i32) {
    %c0_i32 = arith.constant 0 : i32
    %c0_i32_0 = arith.constant 0 : i32
    %c0_i32_1 = arith.constant 0 : i32
    return %c0_i32, %c0_i32_0 : i32, i32
  }
  func.func @transform_2(%arg0: i32) -> (i32, i32) {
    %c0_i32 = arith.constant 0 : i32
    %c0_i32_0 = arith.constant 0 : i32
    %c0_i32_1 = arith.constant 0 : i32
    return %c0_i32, %c0_i32_0 : i32, i32
  }
  func.func @transform_3(%arg0: i32) -> (i32, i32) {
    %c0_i32 = arith.constant 0 : i32
    %c0_i32_0 = arith.constant 0 : i32
    return %arg0, %c0_i32 : i32, i32
  }
}

</mosaic_0001>

<llo_original>
// kernel: tpu_custom_call.1
$region0: #{tpu_custom_call.1}
  #allocation0 [shape = 'u32[]', space=smem, size = 0x4, offset = 0x4, fixed_abs, tag = 'smem constant byte address 0x4 - core index']
  #allocation1 [shape = 'u32[144,128]{1,0:T(1,128)}', space=vmem, size = 0x12000, scoped, tag = 'internal scratch']
  %s0 = inlined_call_operand.hbm [shape: f32[16,32], index: 0, kind: input, shape index: {}]
  %s1 = inlined_call_operand.hbm [shape: f32[32,256], index: 1, kind: input, shape index: {}]
  %s2 = inlined_call_operand.vmem [shape: f32[1,256], index: 2, kind: input, shape index: {}]
  %s3 = inlined_call_operand.hbm [shape: f32[16,256], index: 3, kind: output, shape index: {}]
  %s4 = sld [smem:[#allocation0]]
  $region30: #{tpu_custom_call.1} parent=0
    _
  %s6 = ssub.s32 1, %s4
  %s7 = scalar_select 0, %s6, %s4
  $region1: #{tpu_custom_call.1} parent=0
    #allocation2 [shape = 'u8[8192]{0}', space=vmem, size = 0x2000, scoped, tag = 'input window, operand 0, single buffered']
    #allocation3 [shape = 's32[1]{0}', space=sflag, size = 0x4, scoped, tag = 'scoped memory for tpu_custom_call.1']
    #allocation4 [shape = 's32[1]{0}', space=sflag, size = 0x4, scoped, tag = 'scoped memory for tpu_custom_call.1']
    #allocation5 [shape = 'u8[32768]{0}', space=vmem, size = 0x8000, scoped, tag = 'input window, operand 1, single buffered']
    #allocation6 [shape = 's32[1]{0}', space=sflag, size = 0x4, scoped, tag = 'scoped memory for tpu_custom_call.1']
    #allocation7 [shape = 'u8[16384]{0}', space=vmem, size = 0x4000, scoped, tag = 'output window, operand 0, single buffered']
    %8 = vsyncpa [#allocation3], 0
    %9 = vsyncpa [#allocation6], 0
    %10 = vsyncpa [#allocation4], 0
    // Predicated region
    $region2: #{tpu_custom_call.1} parent=1 // pred_check
      _
    $region3: #{tpu_custom_call.1} parent=1 // pred_check_branch
      %12 = sbr.rel (0) target = $region5
    $region4: #{tpu_custom_call.1} parent=1 // pred_region
      %s14 = ssub.s32 256, 256
      %15 = vsyncadd [#allocation3], %s14
      %s16 = sshll.u32 [#allocation2], 4
      %s17 = int_to_ptr.vmem [resolvable:$true] %s16
      %22 = dma.hbm_to_vmem [thread:$0]  %s0, 256, %s17, [#allocation3], 128, 128, 8
    $region5: #{tpu_custom_call.1} parent=1 // pred_fallthru
      _
    // Predicated region
    $region6: #{tpu_custom_call.1} parent=1 // pred_check
      _
    $region7: #{tpu_custom_call.1} parent=1 // pred_check_branch
      %24 = sbr.rel (0) target = $region9
    $region8: #{tpu_custom_call.1} parent=1 // pred_region
      %s26 = ssub.s32 1024, 1024
      %27 = vsyncadd [#allocation6], %s26
      %s28 = sshll.u32 [#allocation5], 4
      %s29 = int_to_ptr.vmem [resolvable:$true] %s28
      %34 = dma.hbm_to_vmem [thread:$0]  %s1, 1024, %s29, [#allocation6], 256, 256, 16
    $region9: #{tpu_custom_call.1} parent=1 // pred_fallthru
      _
    // Predicated region
    $region10: #{tpu_custom_call.1} parent=1 // pred_check
      _
    $region11: #{tpu_custom_call.1} parent=1 // pred_check_branch
      %36 = sbr.rel (0) target = $region13
    $region12: #{tpu_custom_call.1} parent=1 // pred_region
      _
    $region13: #{tpu_custom_call.1} parent=1 // pred_fallthru
      _
    // Predicated region
    $region14: #{tpu_custom_call.1} parent=1 // pred_check
      _
    $region15: #{tpu_custom_call.1} parent=1 // pred_check_branch
      %38 = sbr.rel (0) target = $region17
    $region16: #{tpu_custom_call.1} parent=1 // pred_region
      %39 = dma.done [#allocation3], 256
    $region17: #{tpu_custom_call.1} parent=1 // pred_fallthru
      _
    // Predicated region
    $region18: #{tpu_custom_call.1} parent=1 // pred_check
      _
    $region19: #{tpu_custom_call.1} parent=1 // pred_check_branch
      %41 = sbr.rel (0) target = $region21
    $region20: #{tpu_custom_call.1} parent=1 // pred_region
      %42 = dma.done [#allocation6], 1024
    $region21: #{tpu_custom_call.1} parent=1 // pred_fallthru
      _
    %v43 = vld [vmem:[#allocation2] sm:$0xff]
    %v44 = vld [vmem:[#allocation2 + $0x8] sm:$0xff]
    %v45 = vld [vmem:[#allocation5] sm:$0xff]
    %v46 = vld [vmem:[#allocation5 + $0x8] sm:$0xff]
    %v47 = vld [vmem:[#allocation5 + $0x10] sm:$0xff]
    %v48 = vld [vmem:[#allocation5 + $0x18] sm:$0xff]
    %v49 = vld [vmem:[#allocation5 + $0x20] sm:$0xff]
    %v50 = vld [vmem:[#allocation5 + $0x28] sm:$0xff]
    %v51 = vld [vmem:[#allocation5 + $0x30] sm:$0xff]
    %v52 = vld [vmem:[#allocation5 + $0x38] sm:$0xff]
    %v53 = vld [vmem:[%s2] sm:$0x3]
    %v55 = vlaneseq
    %v56 = vshrl.u32 %v55, 7
    %v57 = vsub.s32 0, %v56
    %v58 = vrot.slane %v53, %v57
    %v59 = vlaneseq
    %v60 = vshrl.u32 %v59, 7
    %v61 = vsub.s32 1, %v60
    %v62 = vrot.slane %v53, %v61
    %vm65 = vcmask 261120
    %v67 = vsel %vm65, %v43, 0
    %v70 = vsel %vm65, %v44, 0
    %72 = vmatprep.subr.mxu0 %v46
    %73 = vmatpush1.msra.mxu0 %v45
    %74 = vmatprep.subr.mxu0 %v48
    %75 = vmatpush1.msra.mxu0 %v47
    %76 = vmatprep.subr.mxu0 %v50
    %77 = vmatpush1.msra.mxu0 %v49
    %78 = vmatprep.subr.mxu0 %v52
    %79 = vmatpush1.msra.mxu0 %v51
    %80 = vmatprep.subr.mxu0 0.0
    %81 = vmatpush1.msra.mxu0 0.0
    %82 = vmatprep.subr.mxu0 0.0
    %83 = vmatpush1.msra.mxu0 0.0
    %84 = vmatprep.subr.mxu0 0.0
    %85 = vmatpush1.msra.mxu0 0.0
    %86 = vmatprep.subr.mxu0 0.0
    %87 = vmatpush1.msra.mxu0 0.0
    %88 = vmatprep.subr.mxu0 0.0
    %89 = vmatpush1.msra.mxu0 0.0
    %90 = vmatprep.subr.mxu0 0.0
    %91 = vmatpush1.msra.mxu0 0.0
    %92 = vmatprep.subr.mxu0 0.0
    %93 = vmatpush1.msra.mxu0 0.0
    %94 = vmatprep.subr.mxu0 0.0
    %95 = vmatpush1.msra.mxu0 0.0
    %96 = vmatprep.subr.mxu0 0.0
    %97 = vmatpush1.msra.mxu0 0.0
    %98 = vmatprep.subr.mxu0 0.0
    %99 = vmatpush1.msra.mxu0 0.0
    %100 = vmatprep.subr.mxu0 0.0
    %101 = vmatpush1.msra.mxu0 0.0
    %102 = vmatprep.subr.mxu0 0.0
    %103 = vmatpush1.msra.mxu0 0.0
    %104 = vmatprep.subr.mxu0 0.0
    %105 = vmatpush1.msra.mxu0 0.0
    %106 = vmatprep.subr.mxu0 0.0
    %107 = vmatpush1.msra.mxu0 0.0
    %108 = vmatprep.subr.mxu0 0.0
    %109 = vmatpush1.msra.mxu0 0.0
    %110 = vmatprep.subr.mxu0 0.0
    %111 = vmatpush1.msra.mxu0 0.0
    %112 = vmatprep.subr.mxu0 0.0
    %113 = vmatpush1.msra.mxu0 0.0
    %114 = vmatprep.subr.mxu0 0.0
    %115 = vmatpush1.msra.mxu0 0.0
    %116 = vmatprep.subr.mxu0 0.0
    %117 = vmatpush1.msra.mxu0 0.0
    %118 = vmatprep.subr.mxu0 0.0
    %119 = vmatpush1.msra.mxu0 0.0
    %120 = vmatprep.subr.mxu0 0.0
    %121 = vmatpush1.msra.mxu0 0.0
    %122 = vmatprep.subr.mxu0 0.0
    %123 = vmatpush1.msra.mxu0 0.0
    %124 = vmatprep.subr.mxu0 0.0
    %125 = vmatpush1.msra.mxu0 0.0
    %126 = vmatprep.subr.mxu0 0.0
    %127 = vmatpush1.msra.mxu0 0.0
    %128 = vmatprep.subr.mxu0 0.0
    %129 = vmatpush1.msra.mxu0 0.0
    %130 = vmatprep.subr.mxu0 0.0
    %131 = vmatpush1.msra.mxu0 0.0
    %132 = vmatprep.subr.mxu0 0.0
    %133 = vmatpush1.msra.mxu0 0.0
    %134 = vmatprep.subr.mxu0 0.0
    %135 = vmatpush1.msra.mxu0 0.0
    %136 = vmatprep.mubr.f32.mxu0 0.0
    %137 = vmatmul.mubr.f32.gmra.mrb[0].mxu0 %v67
    %v138 = vpop.f32.mrb[0].mxu0
    %v139 = vadd.f32 %v58, %v138
    %v140 = vpop.f32.mrb[0].mxu0
    %v141 = vadd.f32 %v62, %v140
    %142 = vmatprep.mubr.f32.mxu0 0.0
    %143 = vmatmul.mubr.f32.gmra.mrb[0].mxu0 %v70
    %v144 = vpop.f32.mrb[0].mxu0
    %v145 = vadd.f32 %v58, %v144
    %v146 = vpop.f32.mrb[0].mxu0
    %v147 = vadd.f32 %v62, %v146
    %148 = vdwg.mxu0
    %149 = vst [vmem:[#allocation7] sm:$0xff] %v139
    %150 = vst [vmem:[#allocation7 + $0x8] sm:$0xff] %v141
    %151 = vst [vmem:[#allocation7 + $0x10] sm:$0xff] %v145
    %152 = vst [vmem:[#allocation7 + $0x18] sm:$0xff] %v147
    // Predicated region
    $region22: #{tpu_custom_call.1} parent=1 // pred_check
      _
    $region23: #{tpu_custom_call.1} parent=1 // pred_check_branch
      %154 = sbr.rel (0) target = $region25
    $region24: #{tpu_custom_call.1} parent=1 // pred_region
      %s156 = ssub.s32 512, 512
      %157 = vsyncadd [#allocation4], %s156
      %s158 = sshll.u32 [#allocation7], 4
      %s159 = int_to_ptr.vmem [resolvable:$true] %s158
      %164 = dma.vmem_to_hbm [thread:$0]  %s159, 512, %s3, [#allocation4], 256, 256, 16
    $region25: #{tpu_custom_call.1} parent=1 // pred_fallthru
      _
    // Predicated region
    $region26: #{tpu_custom_call.1} parent=1 // pred_check
      _
    $region27: #{tpu_custom_call.1} parent=1 // pred_check_branch
      %166 = sbr.rel (0) target = $region29
    $region28: #{tpu_custom_call.1} parent=1 // pred_region
      %167 = dma.done [#allocation4], 512
    $region29: #{tpu_custom_call.1} parent=1 // pred_fallthru
      _
    %168 = vsyncpa [#allocation3], 1
    %169 = vsyncpa [#allocation6], 1
    %170 = vsyncpa [#allocation4], 1

</llo_original>
